<compile_context>
chip_gen: v6e
topology: v6e:2x2x1
jax: 0.10.0
libtpu: 0.0.40
codegen_flags: <defaults>
</compile_context>

<pallas_src>
import math

import jax
import jax.numpy as jnp
from jax.experimental import pallas as pl
from jax.experimental.pallas import tpu as pltpu


# Conservative: v7x has only 64 MiB VMEM per TensorCore and the table block may
# be double-buffered, so keep the resident table well below half of that
# (leaving room for the output double-buffer).
_RESIDENT_TABLE_LIMIT_BYTES = 20 * 1024 * 1024
_UNROLL = 8  # static inner unroll (tokens per fori_loop iteration)


def _round_up(x, m):
    return (x + m - 1) // m * m


def _make_resident_kernel(block_tokens, scale):
    """T-token-block kernel; the whole embedding table is VMEM-resident."""

    def kernel(ids_ref, table_ref, out_ref):
        base = pl.program_id(0) * block_tokens

        def body(s, carry):
            t0 = s * _UNROLL
            for j in range(_UNROLL):          # static unroll for scheduler visibility
                t = t0 + j
                row = ids_ref[base + t]       # SMEM scalar read (prefetched ids)
                # Dynamic row gather from the VMEM-resident table + VPU scale.
                out_ref[pl.ds(t, 1), :] = table_ref[pl.ds(row, 1), :] * scale
            return carry

        jax.lax.fori_loop(0, block_tokens // _UNROLL, body, 0)
        # TODO(synk): for n_units < 128, pack 128//n_units rows per 128-lane output
        # row (lane-dense vst) -- needs an in-kernel lane concat/relayout.

    return kernel


def _embed_resident(ids, table, scale, max_block_tokens=256):
    n_tokens = ids.shape[0]
    vocab, n_units = table.shape

    block_tokens = min(max_block_tokens, _round_up(n_tokens, _UNROLL))
    block_tokens = _round_up(block_tokens, _UNROLL)
    n_pad = _round_up(n_tokens, block_tokens)
    ids_p = jnp.pad(ids, (0, n_pad - n_tokens))  # padded tokens read row 0, sliced off later
    num_blocks = n_pad // block_tokens

    table_bytes = vocab * n_units * table.dtype.itemsize
    out_block_bytes = block_tokens * n_units * table.dtype.itemsize
    vmem_limit = int(min(48 * 1024 * 1024,
                         max(32 * 1024 * 1024,
                             2 * table_bytes + 4 * out_block_bytes + (4 << 20))))

    grid_spec = pltpu.PrefetchScalarGridSpec(
        num_scalar_prefetch=1,
        grid=(num_blocks,),
        in_specs=[
            # Constant index_map -> the table is DMA'd once and stays resident in VMEM.
            pl.BlockSpec((vocab, n_units), lambda i, ids_ref: (0, 0)),
        ],
        out_specs=pl.BlockSpec((block_tokens, n_units), lambda i, ids_ref: (i, 0)),
    )

    out = pl.pallas_call(
        _make_resident_kernel(block_tokens, scale),
        out_shape=jax.ShapeDtypeStruct((n_pad, n_units), table.dtype),
        grid_spec=grid_spec,
        compiler_params=pltpu.CompilerParams(
            dimension_semantics=("parallel",),  # independent blocks -> both TCs on v7x
            vmem_limit_bytes=vmem_limit,
        ),
    )(ids_p, table)
    return out[:n_tokens]


def _embed_row_gather(ids, table, scale):
    """Fallback when the table does not fit the VMEM budget: one-row-per-step
    index_map gather with deeper pipelining so more row fetches stay in flight."""
    # TODO(synk): a manual multi-outstanding DMA gather (memory_space=pl.ANY +
    # pltpu.make_async_copy) would be the full fix for huge vocabularies.
    n_tokens = ids.shape[0]
    vocab, n_units = table.shape

    def kernel(ids_ref, row_ref, out_ref):
        out_ref[...] = row_ref[...] * scale

    grid_spec = pltpu.PrefetchScalarGridSpec(
        num_scalar_prefetch=1,
        grid=(n_tokens,),
        in_specs=[
            pl.BlockSpec((1, n_units), lambda i, ids_ref: (ids_ref[i], 0),
                         pipeline_mode=pl.Buffered(3)),
        ],
        out_specs=pl.BlockSpec((1, n_units), lambda i, ids_ref: (i, 0)),
    )
    return pl.pallas_call(
        kernel,
        out_shape=jax.ShapeDtypeStruct((n_tokens, n_units), table.dtype),
        grid_spec=grid_spec,
        compiler_params=pltpu.CompilerParams(dimension_semantics=("arbitrary",)),
    )(ids, table)


def word_embedding(x, table):
    """x: int (batch, seq) token ids; table: (vocab, n_units).

    Returns (batch, seq, n_units) == table[x] * sqrt(n_units), matching
    `nn.Embedding(vocab, n_units)(x) * math.sqrt(n_units)`.
    """
    batch, seq = x.shape
    vocab, n_units = table.shape
    n_tokens = batch * seq
    scale = float(math.sqrt(n_units))  # Python float -> inline literal, not a captured array

    ids = jnp.clip(x.reshape(n_tokens).astype(jnp.int32), 0, vocab - 1)
    # TODO(synk): for very large batch*seq, chunk the pallas_call over tokens so
    # the scalar-prefetched ids (padded to next_pow2(4*N) bytes) stay within SMEM.

    table_bytes = vocab * n_units * table.dtype.itemsize
    if table_bytes <= _RESIDENT_TABLE_LIMIT_BYTES:
        out_flat = _embed_resident(ids, table, scale)
    else:
        out_flat = _embed_row_gather(ids, table, scale)

    return out_flat.reshape(batch, seq, n_units)


if __name__ == "__main__":
    key = jax.random.PRNGKey(0)
    k_tab, k_ids = jax.random.split(key)

    batch, seq = 2, 8
    vocab, n_units = 100, 32

    # nn.Embedding default init: weights ~ N(0, 1)
    table = jax.random.normal(k_tab, (vocab, n_units), dtype=jnp.float32)
    x = jax.random.randint(k_ids, (batch, seq), 0, vocab, dtype=jnp.int32)

    out = jax.block_until_ready(word_embedding(x, table))

    # Pure-JAX reference check.
    ref = jnp.take(table, x.reshape(-1), axis=0).reshape(batch, seq, n_units)
    ref = ref * jnp.float32(math.sqrt(n_units))
    assert out.shape == (batch, seq, n_units)
    assert jnp.allclose(out, ref, atol=1e-5, rtol=1e-5)

    print("KERNEL_OK")
</pallas_src>

<mosaic_0001>
module attributes {stable_mosaic.version = 11 : i64} {
  func.func @kernel(%arg0: i32, %arg1: memref<16xi32, #tpu.memory_space<smem>>, %arg2: memref<100x32xf32, #tpu.memory_space<vmem>>, %arg3: memref<16x32xf32, #tpu.memory_space<vmem>>) attributes {dimension_semantics = [#tpu.dimension_semantics<parallel>], iteration_bounds = array<i64: 1>, scalar_prefetch = 1 : i64, scratch_operands = 0 : i64, tpu.core_type = #tpu.core_type<tc>, window_params = [{pipeline_mode = #tpu.pipeline_mode<synchronous>, transform_indices = @transform_0, window_bounds = array<i64: 100, 32>}, {transform_indices = @transform_1, window_bounds = array<i64: 16, 32>}]} {
    %c16_i32 = arith.constant 16 : i32
    %0 = arith.muli %arg0, %c16_i32 : i32
    %c0_i32 = arith.constant 0 : i32
    %c2_i32 = arith.constant 2 : i32
    %1 = arith.addi %c0_i32, %c2_i32 : i32
    %c1_i32 = arith.constant 1 : i32
    scf.for %arg4 = %c0_i32 to %1 step %c1_i32  : i32 {
      %c8_i32 = arith.constant 8 : i32
      %2 = arith.muli %arg4, %c8_i32 : i32
      %c0_i32_1 = arith.constant 0 : i32
      %3 = arith.addi %2, %c0_i32_1 : i32
      %4 = arith.addi %0, %3 : i32
      %5 = arith.index_cast %4 : i32 to index
      %6 = memref.load %arg1[%5] : memref<16xi32, #tpu.memory_space<smem>>
      %7 = arith.index_cast %6 : i32 to index
      %c0 = arith.constant 0 : index
      %8 = vector.load %arg2[%7, %c0] : memref<100x32xf32, #tpu.memory_space<vmem>>, vector<1x32xf32>
      %cst = arith.constant 5.65685415 : f32
      %9 = vector.broadcast %cst : f32 to vector<1x32xf32>
      %10 = arith.mulf %8, %9 : vector<1x32xf32>
      %11 = arith.index_cast %3 : i32 to index
      %c0_2 = arith.constant 0 : index
      %12 = vector.load %arg3[%11, %c0_2] : memref<16x32xf32, #tpu.memory_space<vmem>>, vector<1x32xf32>
      tpu.vector_store %arg3[%11, %c0_2], %10 {strides = array<i32>} : memref<16x32xf32, #tpu.memory_space<vmem>>, vector<1x32xf32>,
      %c1_i32_3 = arith.constant 1 : i32
      %13 = arith.addi %2, %c1_i32_3 : i32
      %14 = arith.addi %0, %13 : i32
      %15 = arith.index_cast %14 : i32 to index
      %16 = memref.load %arg1[%15] : memref<16xi32, #tpu.memory_space<smem>>
      %17 = arith.index_cast %16 : i32 to index
      %c0_4 = arith.constant 0 : index
      %18 = vector.load %arg2[%17, %c0_4] : memref<100x32xf32, #tpu.memory_space<vmem>>, vector<1x32xf32>
      %cst_5 = arith.constant 5.65685415 : f32
      %19 = vector.broadcast %cst_5 : f32 to vector<1x32xf32>
      %20 = arith.mulf %18, %19 : vector<1x32xf32>
      %21 = arith.index_cast %13 : i32 to index
      %c0_6 = arith.constant 0 : index
      %22 = vector.load %arg3[%21, %c0_6] : memref<16x32xf32, #tpu.memory_space<vmem>>, vector<1x32xf32>
      tpu.vector_store %arg3[%21, %c0_6], %20 {strides = array<i32>} : memref<16x32xf32, #tpu.memory_space<vmem>>, vector<1x32xf32>,
      %c2_i32_7 = arith.constant 2 : i32
      %23 = arith.addi %2, %c2_i32_7 : i32
      %24 = arith.addi %0, %23 : i32
      %25 = arith.index_cast %24 : i32 to index
      %26 = memref.load %arg1[%25] : memref<16xi32, #tpu.memory_space<smem>>
      %27 = arith.index_cast %26 : i32 to index
      %c0_8 = arith.constant 0 : index
      %28 = vector.load %arg2[%27, %c0_8] : memref<100x32xf32, #tpu.memory_space<vmem>>, vector<1x32xf32>
      %cst_9 = arith.constant 5.65685415 : f32
      %29 = vector.broadcast %cst_9 : f32 to vector<1x32xf32>
      %30 = arith.mulf %28, %29 : vector<1x32xf32>
      %31 = arith.index_cast %23 : i32 to index
      %c0_10 = arith.constant 0 : index
      %32 = vector.load %arg3[%31, %c0_10] : memref<16x32xf32, #tpu.memory_space<vmem>>, vector<1x32xf32>
      tpu.vector_store %arg3[%31, %c0_10], %30 {strides = array<i32>} : memref<16x32xf32, #tpu.memory_space<vmem>>, vector<1x32xf32>,
      %c3_i32 = arith.constant 3 : i32
      %33 = arith.addi %2, %c3_i32 : i32
      %34 = arith.addi %0, %33 : i32
      %35 = arith.index_cast %34 : i32 to index
      %36 = memref.load %arg1[%35] : memref<16xi32, #tpu.memory_space<smem>>
      %37 = arith.index_cast %36 : i32 to index
      %c0_11 = arith.constant 0 : index
      %38 = vector.load %arg2[%37, %c0_11] : memref<100x32xf32, #tpu.memory_space<vmem>>, vector<1x32xf32>
      %cst_12 = arith.constant 5.65685415 : f32
      %39 = vector.broadcast %cst_12 : f32 to vector<1x32xf32>
      %40 = arith.mulf %38, %39 : vector<1x32xf32>
      %41 = arith.index_cast %33 : i32 to index
      %c0_13 = arith.constant 0 : index
      %42 = vector.load %arg3[%41, %c0_13] : memref<16x32xf32, #tpu.memory_space<vmem>>, vector<1x32xf32>
      tpu.vector_store %arg3[%41, %c0_13], %40 {strides = array<i32>} : memref<16x32xf32, #tpu.memory_space<vmem>>, vector<1x32xf32>,
      %c4_i32 = arith.constant 4 : i32
      %43 = arith.addi %2, %c4_i32 : i32
      %44 = arith.addi %0, %43 : i32
      %45 = arith.index_cast %44 : i32 to index
      %46 = memref.load %arg1[%45] : memref<16xi32, #tpu.memory_space<smem>>
      %47 = arith.index_cast %46 : i32 to index
      %c0_14 = arith.constant 0 : index
      %48 = vector.load %arg2[%47, %c0_14] : memref<100x32xf32, #tpu.memory_space<vmem>>, vector<1x32xf32>
      %cst_15 = arith.constant 5.65685415 : f32
      %49 = vector.broadcast %cst_15 : f32 to vector<1x32xf32>
      %50 = arith.mulf %48, %49 : vector<1x32xf32>
      %51 = arith.index_cast %43 : i32 to index
      %c0_16 = arith.constant 0 : index
      %52 = vector.load %arg3[%51, %c0_16] : memref<16x32xf32, #tpu.memory_space<vmem>>, vector<1x32xf32>
      tpu.vector_store %arg3[%51, %c0_16], %50 {strides = array<i32>} : memref<16x32xf32, #tpu.memory_space<vmem>>, vector<1x32xf32>,
      %c5_i32 = arith.constant 5 : i32
      %53 = arith.addi %2, %c5_i32 : i32
      %54 = arith.addi %0, %53 : i32
      %55 = arith.index_cast %54 : i32 to index
      %56 = memref.load %arg1[%55] : memref<16xi32, #tpu.memory_space<smem>>
      %57 = arith.index_cast %56 : i32 to index
      %c0_17 = arith.constant 0 : index
      %58 = vector.load %arg2[%57, %c0_17] : memref<100x32xf32, #tpu.memory_space<vmem>>, vector<1x32xf32>
      %cst_18 = arith.constant 5.65685415 : f32
      %59 = vector.broadcast %cst_18 : f32 to vector<1x32xf32>
      %60 = arith.mulf %58, %59 : vector<1x32xf32>
      %61 = arith.index_cast %53 : i32 to index
      %c0_19 = arith.constant 0 : index
      %62 = vector.load %arg3[%61, %c0_19] : memref<16x32xf32, #tpu.memory_space<vmem>>, vector<1x32xf32>
      tpu.vector_store %arg3[%61, %c0_19], %60 {strides = array<i32>} : memref<16x32xf32, #tpu.memory_space<vmem>>, vector<1x32xf32>,
      %c6_i32 = arith.constant 6 : i32
      %63 = arith.addi %2, %c6_i32 : i32
      %64 = arith.addi %0, %63 : i32
      %65 = arith.index_cast %64 : i32 to index
      %66 = memref.load %arg1[%65] : memref<16xi32, #tpu.memory_space<smem>>
      %67 = arith.index_cast %66 : i32 to index
      %c0_20 = arith.constant 0 : index
      %68 = vector.load %arg2[%67, %c0_20] : memref<100x32xf32, #tpu.memory_space<vmem>>, vector<1x32xf32>
      %cst_21 = arith.constant 5.65685415 : f32
      %69 = vector.broadcast %cst_21 : f32 to vector<1x32xf32>
      %70 = arith.mulf %68, %69 : vector<1x32xf32>
      %71 = arith.index_cast %63 : i32 to index
      %c0_22 = arith.constant 0 : index
      %72 = vector.load %arg3[%71, %c0_22] : memref<16x32xf32, #tpu.memory_space<vmem>>, vector<1x32xf32>
      tpu.vector_store %arg3[%71, %c0_22], %70 {strides = array<i32>} : memref<16x32xf32, #tpu.memory_space<vmem>>, vector<1x32xf32>,
      %c7_i32 = arith.constant 7 : i32
      %73 = arith.addi %2, %c7_i32 : i32
      %74 = arith.addi %0, %73 : i32
      %75 = arith.index_cast %74 : i32 to index
      %76 = memref.load %arg1[%75] : memref<16xi32, #tpu.memory_space<smem>>
      %77 = arith.index_cast %76 : i32 to index
      %c0_23 = arith.constant 0 : index
      %78 = vector.load %arg2[%77, %c0_23] : memref<100x32xf32, #tpu.memory_space<vmem>>, vector<1x32xf32>
      %cst_24 = arith.constant 5.65685415 : f32
      %79 = vector.broadcast %cst_24 : f32 to vector<1x32xf32>
      %80 = arith.mulf %78, %79 : vector<1x32xf32>
      %81 = arith.index_cast %73 : i32 to index
      %c0_25 = arith.constant 0 : index
      %82 = vector.load %arg3[%81, %c0_25] : memref<16x32xf32, #tpu.memory_space<vmem>>, vector<1x32xf32>
      tpu.vector_store %arg3[%81, %c0_25], %80 {strides = array<i32>} : memref<16x32xf32, #tpu.memory_space<vmem>>, vector<1x32xf32>,
    }
    %c2_i32_0 = arith.constant 2 : i32
    return
  }
  func.func @transform_0(%arg0: i32, %arg1: memref<16xi32, #tpu.memory_space<smem>>) -> (i32, i32) {
    %c0_i32 = arith.constant 0 : i32
    %c0_i32_0 = arith.constant 0 : i32
    %c0_i32_1 = arith.constant 0 : i32
    return %c0_i32, %c0_i32_0 : i32, i32
  }
  func.func @transform_1(%arg0: i32, %arg1: memref<16xi32, #tpu.memory_space<smem>>) -> (i32, i32) {
    %c0_i32 = arith.constant 0 : i32
    %c0_i32_0 = arith.constant 0 : i32
    return %arg0, %c0_i32 : i32, i32
  }
}

</mosaic_0001>

<llo_original>
// kernel: tpu_custom_call.1
$region0: #{tpu_custom_call.1}
  #allocation0 [shape = 'u32[]', space=smem, size = 0x4, offset = 0x4, fixed_abs, tag = 'smem constant byte address 0x4 - core index']
  #allocation1 [shape = 'u32[144,128]{1,0:T(1,128)}', space=vmem, size = 0x12000, scoped, tag = 'internal scratch']
  #allocation2 [shape = 's32[1]{0}', space=sflag, size = 0x4, scoped, tag = 'scoped memory for tpu_custom_call.1']
  #allocation3 [shape = 'u8[512]{0}', space=smem, size = 0x200, scoped, tag = 'prefetched SMEM operand 0']
  %s0 = inlined_call_operand.vmem [shape: s32[16], index: 0, kind: input, shape index: {}]
  %s1 = inlined_call_operand.vmem [shape: f32[100,32], index: 1, kind: input, shape index: {}]
  %s2 = inlined_call_operand.hbm [shape: f32[16,32], index: 2, kind: output, shape index: {}]
  %s3 = sld [smem:[#allocation0]]
  $region21: #{tpu_custom_call.1} parent=0
    _
  %s5 = ssub.s32 1, %s3
  %s6 = scalar_select 0, %s5, %s3
  %s7 = sshll.u32 %s0, 4
  %s8 = int_to_ptr.vmem [resolvable:$true] %s7
  %10 = dma.vmem_to_smem %s8, 16, [#allocation3], [#allocation2]
  %11 = dma.done [#allocation2], 16
  %12 = sfence
  $region1: #{tpu_custom_call.1} parent=0
    #allocation4 [shape = 'u8[8192]{0}', space=vmem, size = 0x2000, scoped, tag = 'output window, operand 0, single buffered']
    #allocation5 [shape = 's32[1]{0}', space=sflag, size = 0x4, scoped, tag = 'scoped memory for tpu_custom_call.1']
    %13 = vsyncpa [#allocation5], 0
    // Predicated region
    $region2: #{tpu_custom_call.1} parent=1 // pred_check
      _
    $region3: #{tpu_custom_call.1} parent=1 // pred_check_branch
      %15 = sbr.rel (0) target = $region5
    $region4: #{tpu_custom_call.1} parent=1 // pred_region
      _
    $region5: #{tpu_custom_call.1} parent=1 // pred_fallthru
      _
    %s16 = smul.u32 0, 16
    loop: start=0, step=1, limit=2
    $region6: #{tpu_custom_call.1} parent=1 // loop_pre_header
      _
    $region7: #{tpu_custom_call.1} parent=1 // loop_header
      %s18 = sphi 0, %s22
      %p19 = scmp.ge.s32.totalorder %s18, 2
    $region8: #{tpu_custom_call.1} parent=1 // loop_header_branch
      %21 = sbr.rel (%p19) target = $region12
    $region9: #{tpu_custom_call.1} parent=1 // loop_body
      %s23 = smul.u32 %s18, 8
      %s24 = sadd.s32 %s16, %s23
      %s25 = sld [smem:[#allocation3 + %s24]]
      %s26 = scalar_lea.vmem %s1, %s25
      %v27 = vld [vmem:[%s26] sm:$0x1]
      %v28 = vmul.f32 %v27, 5.656854
      %s29 = scalar_lea.vmem [#allocation4], %s23
      %vm30 = vcmask 253952
      %31 = vst.msk [vmem:[%s29] sm:$0x1] %vm30, %v28
      %s32 = sadd.s32 %s23, 1
      %s33 = sadd.s32 %s16, %s32
      %s34 = sld [smem:[#allocation3 + %s33]]
      %s35 = scalar_lea.vmem %s1, %s34
      %v36 = vld [vmem:[%s35] sm:$0x1]
      %v37 = vmul.f32 %v36, 5.656854
      %s38 = scalar_lea.vmem [#allocation4], %s32
      %39 = vst.msk [vmem:[%s38] sm:$0x1] %vm30, %v37
      %s40 = sadd.s32 %s23, 2
      %s41 = sadd.s32 %s16, %s40
      %s42 = sld [smem:[#allocation3 + %s41]]
      %s43 = scalar_lea.vmem %s1, %s42
      %v44 = vld [vmem:[%s43] sm:$0x1]
      %v45 = vmul.f32 %v44, 5.656854
      %s46 = scalar_lea.vmem [#allocation4], %s40
      %47 = vst.msk [vmem:[%s46] sm:$0x1] %vm30, %v45
      %s48 = sadd.s32 %s23, 3
      %s49 = sadd.s32 %s16, %s48
      %s50 = sld [smem:[#allocation3 + %s49]]
      %s51 = scalar_lea.vmem %s1, %s50
      %v52 = vld [vmem:[%s51] sm:$0x1]
      %v53 = vmul.f32 %v52, 5.656854
      %s54 = scalar_lea.vmem [#allocation4], %s48
      %55 = vst.msk [vmem:[%s54] sm:$0x1] %vm30, %v53
      %s56 = sadd.s32 %s23, 4
      %s57 = sadd.s32 %s16, %s56
      %s58 = sld [smem:[#allocation3 + %s57]]
      %s59 = scalar_lea.vmem %s1, %s58
      %v60 = vld [vmem:[%s59] sm:$0x1]
      %v61 = vmul.f32 %v60, 5.656854
      %s62 = scalar_lea.vmem [#allocation4], %s56
      %63 = vst.msk [vmem:[%s62] sm:$0x1] %vm30, %v61
      %s64 = sadd.s32 %s23, 5
      %s65 = sadd.s32 %s16, %s64
      %s66 = sld [smem:[#allocation3 + %s65]]
      %s67 = scalar_lea.vmem %s1, %s66
      %v68 = vld [vmem:[%s67] sm:$0x1]
      %v69 = vmul.f32 %v68, 5.656854
      %s70 = scalar_lea.vmem [#allocation4], %s64
      %71 = vst.msk [vmem:[%s70] sm:$0x1] %vm30, %v69
      %s72 = sadd.s32 %s23, 6
      %s73 = sadd.s32 %s16, %s72
      %s74 = sld [smem:[#allocation3 + %s73]]
      %s75 = scalar_lea.vmem %s1, %s74
      %v76 = vld [vmem:[%s75] sm:$0x1]
      %v77 = vmul.f32 %v76, 5.656854
      %s78 = scalar_lea.vmem [#allocation4], %s72
      %79 = vst.msk [vmem:[%s78] sm:$0x1] %vm30, %v77
      %s80 = sadd.s32 %s23, 7
      %s81 = sadd.s32 %s16, %s80
      %s82 = sld [smem:[#allocation3 + %s81]]
      %s83 = scalar_lea.vmem %s1, %s82
      %v84 = vld [vmem:[%s83] sm:$0x1]
      %v85 = vmul.f32 %v84, 5.656854
      %s86 = scalar_lea.vmem [#allocation4], %s80
      %87 = vst.msk [vmem:[%s86] sm:$0x1] %vm30, %v85
    $region10: #{tpu_custom_call.1} parent=1 // loop_footer
      %s22 = sadd.s32 1, %s18
    $region11: #{tpu_custom_call.1} parent=1 // loop_footer_branch
      %17 = sbr.rel target = $region7
    $region12: #{tpu_custom_call.1} parent=1 // loop_exit
      _
    // Predicated region
    $region13: #{tpu_custom_call.1} parent=1 // pred_check
      _
    $region14: #{tpu_custom_call.1} parent=1 // pred_check_branch
      %89 = sbr.rel (0) target = $region16
    $region15: #{tpu_custom_call.1} parent=1 // pred_region
      %s91 = ssub.s32 256, 256
      %92 = vsyncadd [#allocation5], %s91
      %s93 = sshll.u32 [#allocation4], 4
      %s94 = int_to_ptr.vmem [resolvable:$true] %s93
      %99 = dma.vmem_to_hbm [thread:$0]  %s94, 256, %s2, [#allocation5], 128, 128, 8
    $region16: #{tpu_custom_call.1} parent=1 // pred_fallthru
      _
    // Predicated region
    $region17: #{tpu_custom_call.1} parent=1 // pred_check
      _
    $region18: #{tpu_custom_call.1} parent=1 // pred_check_branch
      %101 = sbr.rel (0) target = $region20
    $region19: #{tpu_custom_call.1} parent=1 // pred_region
      %102 = dma.done [#allocation5], 256
    $region20: #{tpu_custom_call.1} parent=1 // pred_fallthru
      _
    %103 = vsyncpa [#allocation5], 1

</llo_original>
